<compile_context>
chip_gen: v7x
topology: tpu7x:2x2x1
jax: 0.10.0
libtpu: 0.0.40
codegen_flags: <defaults>
</compile_context>

<pallas_src>
import functools

import jax
import jax.numpy as jnp
from jax.experimental import pallas as pl
from jax.experimental.pallas import tpu as pltpu


# ---------------------------------------------------------------------------
# Pass 1: global average pool (tiled reduction over HW) + FC1/ReLU/FC2/Sigmoid
# ---------------------------------------------------------------------------
def se_scale_kernel(x_ref, w1_ref, b1_ref, w2_ref, b2_ref, y_ref, acc_ref,
                    *, inv_hw):
    # x_ref : (1, C, THW)  input tile (x dtype)
    # w1_ref: (Cr, C)      torch Linear(C -> Cr) weight
    # b1_ref: (Cr, 1)
    # w2_ref: (C, Cr)      torch Linear(Cr -> C) weight
    # b2_ref: (C, 1)
    # y_ref : (1, C, 1)    output sigmoid scale (f32)
    # acc_ref: (C, 1) f32  spatial-sum accumulator (VMEM scratch)
    hw_i = pl.program_id(1)

    @pl.when(hw_i == 0)
    def _():
        acc_ref[...] = jnp.zeros_like(acc_ref)

    # Accumulate spatial sum in f32 regardless of x's storage dtype.
    x = x_ref[0].astype(jnp.float32)                         # (C, THW)
    acc_ref[...] += jnp.sum(x, axis=-1, keepdims=True)       # (C, 1)

    @pl.when(hw_i == pl.num_programs(1) - 1)
    def _():
        pooled = acc_ref[...] * inv_hw                       # (C, 1) mean, no div
        # fc[0]: Linear(C -> Cr) + ReLU.  W1 @ pooled == pooled @ W1^T
        h = jnp.dot(w1_ref[...], pooled,
                    preferred_element_type=jnp.float32) + b1_ref[...]   # (Cr, 1)
        h = jnp.maximum(h, 0.0)
        # fc[2]: Linear(Cr -> C) + Sigmoid
        y = jnp.dot(w2_ref[...], h,
                    preferred_element_type=jnp.float32) + b2_ref[...]   # (C, 1)
        y_ref[...] = jax.nn.sigmoid(y)[None]                 # (1, C, 1)


# ---------------------------------------------------------------------------
# Pass 2: channel-wise rescale, tiled over (B, HW)
# ---------------------------------------------------------------------------
def se_rescale_kernel(x_ref, y_ref, o_ref):
    # x_ref: (1, C, THW), y_ref: (1, C, 1) f32, o_ref: (1, C, THW)
    x = x_ref[...].astype(jnp.float32)
    o_ref[...] = (x * y_ref[...]).astype(o_ref.dtype)        # lane broadcast


# ---------------------------------------------------------------------------
# Wrapper
# ---------------------------------------------------------------------------
def _choose_hw_tile(hw, c, itemsize, max_tile_bytes=2 * 1024 * 1024):
    """Largest multiple of 128 that divides hw, with block bytes <= cap."""
    if hw % 128 != 0:
        # TODO(synk): non-128-multiple H*W falls back to one full-width tile
        # (masked vst); pad spatial upstream for peak bandwidth.
        return hw
    max_lanes = max(128, (max_tile_bytes // (itemsize * c)) // 128 * 128)
    tile = min(hw, max_lanes)
    while hw % tile != 0:
        tile -= 128
    return tile


def squeeze_excite(x_nchw, w1, b1, w2, b2, *, hw_tile=None):
    """SqueezeExciteBlock forward.

    x_nchw: (B, C, H, W).  Weights follow torch.nn.Linear conventions:
    w1: (Cr, C), b1: (Cr,), w2: (C, Cr), b2: (C,).
    """
    B, C, H, W = x_nchw.shape
    Cr = w1.shape[0]
    HW = H * W
    x = x_nchw.reshape(B, C, HW)
    itemsize = jnp.dtype(x.dtype).itemsize

    thw = hw_tile if (hw_tile is not None and HW % hw_tile == 0) \
        else _choose_hw_tile(HW, C, itemsize)
    n_hw = HW // thw
    inv_hw = 1.0 / float(HW)

    # Parameters in f32, biases as columns (no in-kernel transposes needed).
    w1f = w1.astype(jnp.float32)
    w2f = w2.astype(jnp.float32)
    b1c = b1.reshape(Cr, 1).astype(jnp.float32)
    b2c = b2.reshape(C, 1).astype(jnp.float32)

    vmem_limit = 32 * 1024 * 1024  # explicit, with headroom, valid on v5e/v6e/v7x

    # ---- Pass 1: pooled -> FCs -> sigmoid scale,  y: (B, C, 1) f32 ----------
    y = pl.pallas_call(
        functools.partial(se_scale_kernel, inv_hw=inv_hw),
        out_shape=jax.ShapeDtypeStruct((B, C, 1), jnp.float32),
        grid_spec=pltpu.PrefetchScalarGridSpec(
            num_scalar_prefetch=0,
            grid=(B, n_hw),
            in_specs=[
                pl.BlockSpec((1, C, thw), lambda b, h: (b, 0, h)),
                pl.BlockSpec((Cr, C), lambda b, h: (0, 0)),
                pl.BlockSpec((Cr, 1), lambda b, h: (0, 0)),
                pl.BlockSpec((C, Cr), lambda b, h: (0, 0)),
                pl.BlockSpec((C, 1), lambda b, h: (0, 0)),
            ],
            out_specs=pl.BlockSpec((1, C, 1), lambda b, h: (b, 0, 0)),
            scratch_shapes=[pltpu.VMEM((C, 1), jnp.float32)],
        ),
        compiler_params=pltpu.CompilerParams(
            dimension_semantics=("parallel", "arbitrary"),
            vmem_limit_bytes=vmem_limit,
        ),
        cost_estimate=pl.CostEstimate(
            flops=B * C * HW + 4 * B * C * Cr,
            transcendentals=B * C,
            bytes_accessed=B * C * HW * itemsize + 4 * (2 * C * Cr + Cr + C + B * C),
        ),
    )(x, w1f, b1c, w2f, b2c)

    # ---- Pass 2: out = x * y (broadcast over spatial) ------------------------
    out = pl.pallas_call(
        se_rescale_kernel,
        out_shape=jax.ShapeDtypeStruct((B, C, HW), x.dtype),
        grid_spec=pltpu.PrefetchScalarGridSpec(
            num_scalar_prefetch=0,
            grid=(B, n_hw),
            in_specs=[
                pl.BlockSpec((1, C, thw), lambda b, h: (b, 0, h)),
                pl.BlockSpec((1, C, 1), lambda b, h: (b, 0, 0)),
            ],
            out_specs=pl.BlockSpec((1, C, thw), lambda b, h: (b, 0, h)),
        ),
        compiler_params=pltpu.CompilerParams(
            dimension_semantics=("parallel", "parallel"),
            vmem_limit_bytes=vmem_limit,
        ),
        cost_estimate=pl.CostEstimate(
            flops=B * C * HW,
            transcendentals=0,
            bytes_accessed=2 * B * C * HW * itemsize + 4 * B * C,
        ),
    )(x, y)

    return out.reshape(B, C, H, W)


def squeeze_excite_ref(x, w1, b1, w2, b2):
    """Pure-JAX reference matching the PyTorch module."""
    pooled = jnp.mean(x, axis=(2, 3))                        # (B, C)
    h = jnp.maximum(pooled @ w1.T + b1, 0.0)                 # (B, Cr)
    y = jax.nn.sigmoid(h @ w2.T + b2)                        # (B, C)
    return x * y[:, :, None, None]


if __name__ == "__main__":
    # Small shapes consistent with the module: in_features=32, reduction=4 -> Cr=8
    B, C, H, W = 2, 32, 32, 32
    reduction = 4
    Cr = C // reduction

    key = jax.random.PRNGKey(0)
    kx, k1, k2, k3, k4 = jax.random.split(key, 5)
    x = jax.random.normal(kx, (B, C, H, W), dtype=jnp.float32)
    w1 = jax.random.normal(k1, (Cr, C), dtype=jnp.float32) * 0.1   # Linear(C -> Cr)
    b1 = jax.random.normal(k2, (Cr,), dtype=jnp.float32) * 0.1
    w2 = jax.random.normal(k3, (C, Cr), dtype=jnp.float32) * 0.1   # Linear(Cr -> C)
    b2 = jax.random.normal(k4, (C,), dtype=jnp.float32) * 0.1

    # hw_tile=256 forces a 4-step HW reduction grid even at this small shape,
    # exercising the accumulate-then-finalize pipeline.
    out = squeeze_excite(x, w1, b1, w2, b2, hw_tile=256)
    out = jax.block_until_ready(out)

    ref = squeeze_excite_ref(x, w1, b1, w2, b2)
    assert out.shape == (B, C, H, W)
    assert jnp.max(jnp.abs(out - ref)) < 1e-5, "mismatch vs reference"

    print("KERNEL_OK")
</pallas_src>

<mosaic_0001>
module attributes {stable_mosaic.version = 11 : i64} {
  func.func @se_scale_kernel(%arg0: i32, %arg1: i32, %arg2: memref<1x32x256xf32, #tpu.memory_space<vmem>>, %arg3: memref<8x32xf32, #tpu.memory_space<vmem>>, %arg4: memref<8x1xf32, #tpu.memory_space<vmem>>, %arg5: memref<32x8xf32, #tpu.memory_space<vmem>>, %arg6: memref<32x1xf32, #tpu.memory_space<vmem>>, %arg7: memref<1x32x1xf32, #tpu.memory_space<vmem>>, %arg8: memref<32x1xf32, #tpu.memory_space<vmem>>) attributes {dimension_semantics = [#tpu.dimension_semantics<parallel>, #tpu.dimension_semantics<arbitrary>], iteration_bounds = array<i64: 2, 4>, scalar_prefetch = 0 : i64, scratch_operands = 1 : i64, tpu.core_type = #tpu.core_type<tc>, window_params = [{transform_indices = @transform_0, window_bounds = array<i64: 1, 32, 256>}, {pipeline_mode = #tpu.pipeline_mode<synchronous>, transform_indices = @transform_1, window_bounds = array<i64: 8, 32>}, {pipeline_mode = #tpu.pipeline_mode<synchronous>, transform_indices = @transform_2, window_bounds = array<i64: 8, 1>}, {pipeline_mode = #tpu.pipeline_mode<synchronous>, transform_indices = @transform_3, window_bounds = array<i64: 32, 8>}, {pipeline_mode = #tpu.pipeline_mode<synchronous>, transform_indices = @transform_4, window_bounds = array<i64: 32, 1>}, {transform_indices = @transform_5, window_bounds = array<i64: 1, 32, 1>}]} {
    %c0_i32 = arith.constant 0 : i32
    %0 = arith.cmpi eq, %arg1, %c0_i32 : i32
    %1 = arith.extui %0 : i1 to i32
    %c0_i32_0 = arith.constant 0 : i32
    %2 = arith.cmpi ne, %1, %c0_i32_0 : i32
    scf.if %2 {
      %cst_8 = arith.constant 0.000000e+00 : f32
      %13 = vector.broadcast %cst_8 : f32 to vector<32x1xf32>
      %c0_9 = arith.constant 0 : index
      %c0_10 = arith.constant 0 : index
      %14 = vector.load %arg8[%c0_9, %c0_10] : memref<32x1xf32, #tpu.memory_space<vmem>>, vector<32x1xf32>
      tpu.vector_store %arg8[%c0_9, %c0_10], %13 {strides = array<i32>} : memref<32x1xf32, #tpu.memory_space<vmem>>, vector<32x1xf32>,
    } else {
    }
    %c0 = arith.constant 0 : index
    %c0_1 = arith.constant 0 : index
    %c0_2 = arith.constant 0 : index
    %3 = vector.load %arg2[%c0, %c0_1, %c0_2] : memref<1x32x256xf32, #tpu.memory_space<vmem>>, vector<1x32x256xf32>
    %4 = vector.shape_cast %3 : vector<1x32x256xf32> to vector<32x256xf32>
    %c0_3 = arith.constant 0 : index
    %c0_4 = arith.constant 0 : index
    %5 = vector.load %arg8[%c0_3, %c0_4] : memref<32x1xf32, #tpu.memory_space<vmem>>, vector<32x1xf32>
    %cst = arith.constant dense<0.000000e+00> : vector<32xf32>
    %6 = vector.multi_reduction <add>, %4, %cst [1] : vector<32x256xf32> to vector<32xf32>
    %7 = vector.shape_cast %6 : vector<32xf32> to vector<32x1xf32>
    %8 = arith.addf %5, %7 : vector<32x1xf32>
    %c0_5 = arith.constant 0 : index
    %c0_6 = arith.constant 0 : index
    %9 = vector.load %arg8[%c0_5, %c0_6] : memref<32x1xf32, #tpu.memory_space<vmem>>, vector<32x1xf32>
    tpu.vector_store %arg8[%c0_5, %c0_6], %8 {strides = array<i32>} : memref<32x1xf32, #tpu.memory_space<vmem>>, vector<32x1xf32>,
    %c3_i32 = arith.constant 3 : i32
    %10 = arith.cmpi eq, %arg1, %c3_i32 : i32
    %11 = arith.extui %10 : i1 to i32
    %c0_i32_7 = arith.constant 0 : i32
    %12 = arith.cmpi ne, %11, %c0_i32_7 : i32
    scf.if %12 {
      %c0_8 = arith.constant 0 : index
      %c0_9 = arith.constant 0 : index
      %13 = vector.load %arg8[%c0_8, %c0_9] : memref<32x1xf32, #tpu.memory_space<vmem>>, vector<32x1xf32>
      %cst_10 = arith.constant 9.765625E-4 : f32
      %14 = vector.broadcast %cst_10 : f32 to vector<32x1xf32>
      %15 = arith.mulf %13, %14 : vector<32x1xf32>
      %c0_11 = arith.constant 0 : index
      %c0_12 = arith.constant 0 : index
      %16 = vector.load %arg3[%c0_11, %c0_12] : memref<8x32xf32, #tpu.memory_space<vmem>>, vector<8x32xf32>
      %cst_13 = arith.constant dense<0.000000e+00> : vector<8x1xf32>
      %17 = tpu.matmul %16, %15, %cst_13 {dimension_numbers = #tpu.dot_dimension_numbers<[1], [0], [0], [1], [0, 0, 1, 1], [], []>} : vector<8x32xf32>, vector<32x1xf32>, vector<8x1xf32> -> vector<8x1xf32>
      %c0_14 = arith.constant 0 : index
      %c0_15 = arith.constant 0 : index
      %18 = vector.load %arg4[%c0_14, %c0_15] : memref<8x1xf32, #tpu.memory_space<vmem>>, vector<8x1xf32>
      %19 = arith.addf %17, %18 : vector<8x1xf32>
      %cst_16 = arith.constant 0.000000e+00 : f32
      %20 = vector.broadcast %cst_16 : f32 to vector<8x1xf32>
      %21 = arith.maximumf %19, %20 : vector<8x1xf32>
      %c0_17 = arith.constant 0 : index
      %c0_18 = arith.constant 0 : index
      %22 = vector.load %arg5[%c0_17, %c0_18] : memref<32x8xf32, #tpu.memory_space<vmem>>, vector<32x8xf32>
      %cst_19 = arith.constant dense<0.000000e+00> : vector<32x1xf32>
      %23 = tpu.matmul %22, %21, %cst_19 {dimension_numbers = #tpu.dot_dimension_numbers<[1], [0], [0], [1], [0, 0, 1, 1], [], []>} : vector<32x8xf32>, vector<8x1xf32>, vector<32x1xf32> -> vector<32x1xf32>
      %c0_20 = arith.constant 0 : index
      %c0_21 = arith.constant 0 : index
      %24 = vector.load %arg6[%c0_20, %c0_21] : memref<32x1xf32, #tpu.memory_space<vmem>>, vector<32x1xf32>
      %25 = arith.addf %23, %24 : vector<32x1xf32>
      %26 = arith.negf %25 : vector<32x1xf32>
      %27 = math.exp %26 : vector<32x1xf32>
      %cst_22 = arith.constant 1.000000e+00 : f32
      %28 = vector.broadcast %cst_22 : f32 to vector<32x1xf32>
      %29 = arith.addf %28, %27 : vector<32x1xf32>
      %30 = arith.divf %28, %29 : vector<32x1xf32>
      %31 = vector.shape_cast %30 : vector<32x1xf32> to vector<1x32x1xf32>
      %c0_23 = arith.constant 0 : index
      %c0_24 = arith.constant 0 : index
      %c0_25 = arith.constant 0 : index
      %32 = vector.load %arg7[%c0_23, %c0_24, %c0_25] : memref<1x32x1xf32, #tpu.memory_space<vmem>>, vector<1x32x1xf32>
      tpu.vector_store %arg7[%c0_23, %c0_24, %c0_25], %31 {strides = array<i32>} : memref<1x32x1xf32, #tpu.memory_space<vmem>>, vector<1x32x1xf32>,
    } else {
    }
    return
  }
  func.func @transform_0(%arg0: i32, %arg1: i32) -> (i32, i32, i32) {
    %c0_i32 = arith.constant 0 : i32
    %c0_i32_0 = arith.constant 0 : i32
    return %arg0, %c0_i32, %arg1 : i32, i32, i32
  }
  func.func @transform_1(%arg0: i32, %arg1: i32) -> (i32, i32) {
    %c0_i32 = arith.constant 0 : i32
    %c0_i32_0 = arith.constant 0 : i32
    %c0_i32_1 = arith.constant 0 : i32
    return %c0_i32, %c0_i32_0 : i32, i32
  }
  func.func @transform_2(%arg0: i32, %arg1: i32) -> (i32, i32) {
    %c0_i32 = arith.constant 0 : i32
    %c0_i32_0 = arith.constant 0 : i32
    %c0_i32_1 = arith.constant 0 : i32
    return %c0_i32, %c0_i32_0 : i32, i32
  }
  func.func @transform_3(%arg0: i32, %arg1: i32) -> (i32, i32) {
    %c0_i32 = arith.constant 0 : i32
    %c0_i32_0 = arith.constant 0 : i32
    %c0_i32_1 = arith.constant 0 : i32
    return %c0_i32, %c0_i32_0 : i32, i32
  }
  func.func @transform_4(%arg0: i32, %arg1: i32) -> (i32, i32) {
    %c0_i32 = arith.constant 0 : i32
    %c0_i32_0 = arith.constant 0 : i32
    %c0_i32_1 = arith.constant 0 : i32
    return %c0_i32, %c0_i32_0 : i32, i32
  }
  func.func @transform_5(%arg0: i32, %arg1: i32) -> (i32, i32, i32) {
    %c0_i32 = arith.constant 0 : i32
    %c0_i32_0 = arith.constant 0 : i32
    %c0_i32_1 = arith.constant 0 : i32
    return %arg0, %c0_i32, %c0_i32_0 : i32, i32, i32
  }
}

</mosaic_0001>

<llo_original>
// kernel: tpu_custom_call.1
$region0: #{tpu_custom_call.1}
  #allocation0 [shape = 'u32[]', space=smem, size = 0x4, offset = 0x4, fixed_abs, tag = 'smem constant byte address 0x4 - core index']
  #allocation1 [shape = 'u32[144,128]{1,0:T(1,128)}', space=vmem, size = 0x12000, scoped, tag = 'internal scratch']
  #allocation2 [shape = 'f32[32,1]{1,0:T(8,128)}', space=vmem, size = 0x4000, scoped, tag = 'scratch operand']
  %s0 = inlined_call_operand.hbm [shape: f32[2,32,1024], index: 0, kind: input, shape index: {}]
  %s1 = inlined_call_operand.vmem [shape: f32[8,32], index: 1, kind: input, shape index: {}]
  %s2 = inlined_call_operand.vmem [shape: f32[8,1], index: 2, kind: input, shape index: {}]
  %s3 = inlined_call_operand.vmem [shape: f32[32,8], index: 3, kind: input, shape index: {}]
  %s4 = inlined_call_operand.vmem [shape: f32[32,1], index: 4, kind: input, shape index: {}]
  %s5 = inlined_call_operand.vmem [shape: f32[2,32,1], index: 5, kind: output, shape index: {}]
  %s6 = sld [smem:[#allocation0]]
  $region65: #{tpu_custom_call.1} parent=0
    _
  %s8 = ssub.s32 1, %s6
  %s9 = scalar_select 0, %s8, %s6
  $region1: #{tpu_custom_call.1} parent=0
    #allocation3 [shape = 'u8[65536]{0}', space=vmem, size = 0x10000, scoped, tag = 'input window, operand 0']
    #allocation4 [shape = 's32[2]{0}', space=sflag, size = 0x8, scoped, tag = 'scoped memory for tpu_custom_call.1']
    %10 = vsyncpa [#allocation4], 0
    %s11 = scalar_lea.sflag [#allocation4], 1
    %12 = vsyncpa %s11, 0
    loop: start=0, step=1, limit=10
    $region2: #{tpu_custom_call.1} parent=1 // loop_pre_header
      _
    $region3: #{tpu_custom_call.1} parent=1 // loop_header
      %s14 = sphi 0, %s18
      %p15 = scmp.ge.s32.totalorder %s14, 10
      %s21 = sphi 0, %s33
      %s22 = sphi 0, %s29
      %s23 = sphi 0, %s21
      %s24 = sphi 0, %s22
      %s25 = sphi 0, %s23
      %s26 = sphi 0, %s24
      %s38 = sphi 0, %s40
      %s41 = sphi 0, %s38
      %s42 = sphi 0, %s41
      %s58 = sphi 0, %s42
      %s62 = sphi 0, %s62
      %s64 = sphi 0, %s62
      %s65 = sphi 0, %s64
      %s79 = sphi 0, %s65
      %s83 = sphi 0, %s83
      %s85 = sphi 0, %s83
      %s86 = sphi 0, %s85
      %s100 = sphi 0, %s86
      %s104 = sphi 0, %s104
      %s106 = sphi 0, %s104
      %s107 = sphi 0, %s106
      %s121 = sphi 0, %s107
      %s125 = sphi 0, %s125
      %s127 = sphi 0, %s125
      %s128 = sphi 0, %s127
      %s142 = sphi 0, %s128
      %s148 = sphi 0, %s150
      %s151 = sphi 0, %s148
      %s152 = sphi 0, %s151
      %s168 = sphi 0, %s152
    $region4: #{tpu_custom_call.1} parent=1 // loop_header_branch
      %17 = sbr.rel (%p15) target = $region8
    $region5: #{tpu_custom_call.1} parent=1 // loop_body
      %s19 = ssub.s32 %s14, 1
      %s20 = ssub.s32 %s14, 2
      %s27 = sadd.s32 1, %s22
      %p28 = scmp.ge.s32.totalorder %s27, 4
      %s29 = scalar_select %p28, 0, %s27
      %s30 = sadd.s32 1, %s21
      %s31 = scalar_select %p28, %s30, %s21
      %p32 = scmp.ge.s32.totalorder %s31, 2
      %s33 = scalar_select %p32, 0, %s31
      %s34 = ssub.s32 %s21, %s33
      %s35 = ssub.s32 %s22, %s29
      %s36 = sor.u32 %s34, %s35
      %p37 = scmp.eq.s32.totalorder %s36, 0
      %s39 = sadd.s32 %s38, 1
      %s40 = scalar_select %p37, %s38, %s39
      %p43 = pneg %p37
      %p44 = scmp.eq.s32.totalorder %s14, 7
      %p45 = por %p43, %p44
      %p46 = scmp.ne.s32.totalorder %s38, %s41
      %p47 = scmp.eq.s32.totalorder %s14, 0
      %p48 = por %p46, %p47
      %p49 = scmp.ne.s32.totalorder %s38, %s41
      %p50 = scmp.eq.s32.totalorder %s19, 7
      %p51 = por %p49, %p50
      %p52 = scmp.ne.s32.totalorder %s41, %s42
      %p53 = scmp.eq.s32.totalorder %s19, 0
      %p54 = por %p52, %p53
      %p55 = scmp.ne.s32.totalorder %s41, %s42
      %p56 = scmp.eq.s32.totalorder %s20, 7
      %p57 = por %p55, %p56
      %p59 = scmp.ne.s32.totalorder %s42, %s58
      %p60 = scmp.eq.s32.totalorder %s20, 0
      %p61 = por %p59, %p60
      %s63 = sadd.s32 %s62, 1
      %p66 = scmp.eq.s32.totalorder %s14, 7
      %p67 = scmp.ne.s32.totalorder %s62, %s64
      %p68 = scmp.eq.s32.totalorder %s14, 0
      %p69 = por %p67, %p68
      %p70 = scmp.ne.s32.totalorder %s62, %s64
      %p71 = scmp.eq.s32.totalorder %s19, 7
      %p72 = por %p70, %p71
      %p73 = scmp.ne.s32.totalorder %s64, %s65
      %p74 = scmp.eq.s32.totalorder %s19, 0
      %p75 = por %p73, %p74
      %p76 = scmp.ne.s32.totalorder %s64, %s65
      %p77 = scmp.eq.s32.totalorder %s20, 7
      %p78 = por %p76, %p77
      %p80 = scmp.ne.s32.totalorder %s65, %s79
      %p81 = scmp.eq.s32.totalorder %s20, 0
      %p82 = por %p80, %p81
      %s84 = sadd.s32 %s83, 1
      %p87 = scmp.eq.s32.totalorder %s14, 7
      %p88 = scmp.ne.s32.totalorder %s83, %s85
      %p89 = scmp.eq.s32.totalorder %s14, 0
      %p90 = por %p88, %p89
      %p91 = scmp.ne.s32.totalorder %s83, %s85
      %p92 = scmp.eq.s32.totalorder %s19, 7
      %p93 = por %p91, %p92
      %p94 = scmp.ne.s32.totalorder %s85, %s86
      %p95 = scmp.eq.s32.totalorder %s19, 0
      %p96 = por %p94, %p95
      %p97 = scmp.ne.s32.totalorder %s85, %s86
      %p98 = scmp.eq.s32.totalorder %s20, 7
      %p99 = por %p97, %p98
      %p101 = scmp.ne.s32.totalorder %s86, %s100
      %p102 = scmp.eq.s32.totalorder %s20, 0
      %p103 = por %p101, %p102
      %s105 = sadd.s32 %s104, 1
      %p108 = scmp.eq.s32.totalorder %s14, 7
      %p109 = scmp.ne.s32.totalorder %s104, %s106
      %p110 = scmp.eq.s32.totalorder %s14, 0
      %p111 = por %p109, %p110
      %p112 = scmp.ne.s32.totalorder %s104, %s106
      %p113 = scmp.eq.s32.totalorder %s19, 7
      %p114 = por %p112, %p113
      %p115 = scmp.ne.s32.totalorder %s106, %s107
      %p116 = scmp.eq.s32.totalorder %s19, 0
      %p117 = por %p115, %p116
      %p118 = scmp.ne.s32.totalorder %s106, %s107
      %p119 = scmp.eq.s32.totalorder %s20, 7
      %p120 = por %p118, %p119
      %p122 = scmp.ne.s32.totalorder %s107, %s121
      %p123 = scmp.eq.s32.totalorder %s20, 0
      %p124 = por %p122, %p123
      %s126 = sadd.s32 %s125, 1
      %p129 = scmp.eq.s32.totalorder %s14, 7
      %p130 = scmp.ne.s32.totalorder %s125, %s127
      %p131 = scmp.eq.s32.totalorder %s14, 0
      %p132 = por %p130, %p131
      %p133 = scmp.ne.s32.totalorder %s125, %s127
      %p134 = scmp.eq.s32.totalorder %s19, 7
      %p135 = por %p133, %p134
      %p136 = scmp.ne.s32.totalorder %s127, %s128
      %p137 = scmp.eq.s32.totalorder %s19, 0
      %p138 = por %p136, %p137
      %p139 = scmp.ne.s32.totalorder %s127, %s128
      %p140 = scmp.eq.s32.totalorder %s20, 7
      %p141 = por %p139, %p140
      %p143 = scmp.ne.s32.totalorder %s128, %s142
      %p144 = scmp.eq.s32.totalorder %s20, 0
      %p145 = por %p143, %p144
      %s146 = ssub.s32 %s21, %s33
      %p147 = scmp.eq.s32.totalorder %s146, 0
      %s149 = sadd.s32 %s148, 1
      %s150 = scalar_select %p147, %s148, %s149
      %p153 = pneg %p147
      %p154 = scmp.eq.s32.totalorder %s14, 7
      %p155 = por %p153, %p154
      %p156 = scmp.ne.s32.totalorder %s148, %s151
      %p157 = scmp.eq.s32.totalorder %s14, 0
      %p158 = por %p156, %p157
      %p159 = scmp.ne.s32.totalorder %s148, %s151
      %p160 = scmp.eq.s32.totalorder %s19, 7
      %p161 = por %p159, %p160
      %p162 = scmp.ne.s32.totalorder %s151, %s152
      %p163 = scmp.eq.s32.totalorder %s19, 0
      %p164 = por %p162, %p163
      %p165 = scmp.ne.s32.totalorder %s151, %s152
      %p166 = scmp.eq.s32.totalorder %s20, 7
      %p167 = por %p165, %p166
      %p169 = scmp.ne.s32.totalorder %s152, %s168
      %p170 = scmp.eq.s32.totalorder %s20, 0
      %p171 = por %p169, %p170
      %p172 = scmp.le.s32.totalorder 1, %s14
      %p173 = scmp.lt.s32.totalorder %s14, 9
      %p174 = pnand %p172, %p173
      %p175 = pneg %p174
      // Predicated region
      $region9: #{tpu_custom_call.1} parent=5 // pred_check
        _
      $region10: #{tpu_custom_call.1} parent=5 // pred_check_branch
        %177 = sbr.rel (%p174) target = $region12
      $region11: #{tpu_custom_call.1} parent=5 // pred_region
        %s178 = ssub.s32 %s14, 1
        // Predicated region
        $region13: #{tpu_custom_call.1} parent=11 // pred_check
          %p179 = pneg %p75
        $region14: #{tpu_custom_call.1} parent=11 // pred_check_branch
          %181 = sbr.rel (%p179) target = $region16
        $region15: #{tpu_custom_call.1} parent=11 // pred_region
          _
        $region16: #{tpu_custom_call.1} parent=11 // pred_fallthru
          _
        // Predicated region
        $region17: #{tpu_custom_call.1} parent=11 // pred_check
          %p182 = pneg %p96
        $region18: #{tpu_custom_call.1} parent=11 // pred_check_branch
          %184 = sbr.rel (%p182) target = $region20
        $region19: #{tpu_custom_call.1} parent=11 // pred_region
          _
        $region20: #{tpu_custom_call.1} parent=11 // pred_fallthru
          _
        // Predicated region
        $region21: #{tpu_custom_call.1} parent=11 // pred_check
          %p185 = pneg %p117
        $region22: #{tpu_custom_call.1} parent=11 // pred_check_branch
          %187 = sbr.rel (%p185) target = $region24
        $region23: #{tpu_custom_call.1} parent=11 // pred_region
          _
        $region24: #{tpu_custom_call.1} parent=11 // pred_fallthru
          _
        // Predicated region
        $region25: #{tpu_custom_call.1} parent=11 // pred_check
          %p188 = pneg %p138
        $region26: #{tpu_custom_call.1} parent=11 // pred_check_branch
          %190 = sbr.rel (%p188) target = $region28
        $region27: #{tpu_custom_call.1} parent=11 // pred_region
          _
        $region28: #{tpu_custom_call.1} parent=11 // pred_fallthru
          _
      $region12: #{tpu_custom_call.1} parent=5 // pred_fallthru
        _
      %p191 = scmp.lt.s32.totalorder %s14, 8
      // Predicated region
      $region29: #{tpu_custom_call.1} parent=5 // pred_check
        %p192 = pneg %p191
      $region30: #{tpu_custom_call.1} parent=5 // pred_check_branch
        %194 = sbr.rel (%p192) target = $region32
      $region31: #{tpu_custom_call.1} parent=5 // pred_region
        // Predicated region
        $region33: #{tpu_custom_call.1} parent=31 // pred_check
          %p195 = pneg %p48
        $region34: #{tpu_custom_call.1} parent=31 // pred_check_branch
          %197 = sbr.rel (%p195) target = $region36
        $region35: #{tpu_custom_call.1} parent=31 // pred_region
          %s198 = sand.u32 %s38, 1
          %s199 = scalar_lea.sflag [#allocation4], %s198
          %s200 = sand.u32 %s38, 1
          %s201 = smul.addr %s200, 64
          %s202 = scalar_lea.vmem [#allocation3], %s201
          %s203 = smul.u32 2, %s22
          %s205 = ssub.s32 1024, 1024
          %206 = vsyncadd %s199, %s205
          %s207 = smul.addr %s21, 32
          %s208 = sadd.s32 %s203, %s207
          %s209 = smul.addr %s208, 128
          %s210 = scalar_lea.hbm %s0, %s209
          %s211 = sshll.u32 %s202, 4
          %s212 = int_to_ptr.vmem [resolvable:$true] %s211
          %217 = dma.hbm_to_vmem [thread:$0]  %s210, 1024, %s212, %s199, 1024, 256, 16
        $region36: #{tpu_custom_call.1} parent=31 // pred_fallthru
          _
      $region32: #{tpu_custom_call.1} parent=5 // pred_fallthru
        _
      %p218 = scmp.le.s32.totalorder 1, %s14
      %p219 = scmp.lt.s32.totalorder %s14, 9
      %p220 = pnand %p218, %p219
      %p221 = pneg %p220
      // Predicated region
      $region37: #{tpu_custom_call.1} parent=5 // pred_check
        _
      $region38: #{tpu_custom_call.1} parent=5 // pred_check_branch
        %223 = sbr.rel (%p220) target = $region40
      $region39: #{tpu_custom_call.1} parent=5 // pred_region
        %s224 = ssub.s32 %s14, 1
        %s225 = sand.u32 %s41, 1
        %s226 = scalar_lea.sflag [#allocation4], %s225
        %s227 = sand.u32 %s41, 1
        %s228 = smul.addr %s227, 64
        %s229 = scalar_lea.vmem [#allocation3], %s228
        // Predicated region
        $region41: #{tpu_custom_call.1} parent=39 // pred_check
          %p230 = pneg %p54
        $region42: #{tpu_custom_call.1} parent=39 // pred_check_branch
          %232 = sbr.rel (%p230) target = $region44
        $region43: #{tpu_custom_call.1} parent=39 // pred_region
          %233 = dma.done %s226, 1024
        $region44: #{tpu_custom_call.1} parent=39 // pred_fallthru
          _
        %s234 = sand.u32 %s41, 1
        %s235 = scalar_lea.sflag [#allocation4], %s234
        %s236 = sand.u32 %s41, 1
        %s237 = smul.addr %s236, 64
        %s238 = scalar_lea.vmem [#allocation3], %s237
        %p239 = pneg %p54
        %p240 = pneg %p51
        %p241 = pneg %p75
        %p242 = pneg %p72
        %p243 = pneg %p96
        %p244 = pneg %p93
        %p245 = pneg %p117
        %p246 = pneg %p114
        %p247 = pneg %p138
        %p248 = pneg %p135
        %p249 = pneg %p164
        %p250 = pneg %p161
        %p251 = scmp.lt.s32.totalorder %s23, 1
        %s252 = scalar_select %p251, %s23, 1
        %s253 = smul.addr %s252, 4
        %s254 = smul.addr %s253, 8
        %s255 = scalar_lea.vmem %s5, %s254
        %s256 = smul.u32 2, %s24
        %p257 = scmp.lt.s32.totalorder %s23, 1
        %s258 = scalar_select %p257, %s23, 1
        %s259 = smul.addr %s258, 4
        %s260 = smul.addr %s259, 8
        %s261 = scalar_lea.vmem %s5, %s260
        %p262 = scmp.eq.s32.totalorder %s24, 0
        // Predicated region
        $region45: #{tpu_custom_call.1} parent=39 // pred_check
          %p263 = pneg %p262
        $region46: #{tpu_custom_call.1} parent=39 // pred_check_branch
          %265 = sbr.rel (%p263) target = $region48
        $region47: #{tpu_custom_call.1} parent=39 // pred_region
          %vm266 = vcmask 7168
          %267 = vst.msk [vmem:[#allocation2] sm:$0xff] %vm266, 0.0
          %268 = vst.msk [vmem:[#allocation2 + $0x8] sm:$0xff] %vm266, 0.0
          %269 = vst.msk [vmem:[#allocation2 + $0x10] sm:$0xff] %vm266, 0.0
          %270 = vst.msk [vmem:[#allocation2 + $0x18] sm:$0xff] %vm266, 0.0
        $region48: #{tpu_custom_call.1} parent=39 // pred_fallthru
          _
        %v271 = vld [vmem:[%s229] sm:$0xff]
        %v272 = vld [vmem:[%s229 + $0x8] sm:$0xff]
        %v273 = vld [vmem:[%s229 + $0x10] sm:$0xff]
        %v274 = vld [vmem:[%s229 + $0x18] sm:$0xff]
        %v275 = vld [vmem:[%s229 + $0x20] sm:$0xff]
        %v276 = vld [vmem:[%s229 + $0x28] sm:$0xff]
        %v277 = vld [vmem:[%s229 + $0x30] sm:$0xff]
        %v278 = vld [vmem:[%s229 + $0x38] sm:$0xff]
        %v279 = vld [vmem:[#allocation2] sm:$0xff]
        %v280 = vld [vmem:[#allocation2 + $0x8] sm:$0xff]
        %v281 = vld [vmem:[#allocation2 + $0x10] sm:$0xff]
        %v282 = vld [vmem:[#allocation2 + $0x18] sm:$0xff]
        %v283 = vadd.f32 %v271, %v272
        %284 = vadd.xlane.f32.xlu0 %v283
        %v285 = vpop.xlane.xlu0 %284
        %v286 = vadd.f32 %v273, %v274
        %287 = vadd.xlane.f32.xlu0 %v286
        %v288 = vpop.xlane.xlu0 %287
        %v289 = vadd.f32 %v275, %v276
        %290 = vadd.xlane.f32.xlu0 %v289
        %v291 = vpop.xlane.xlu0 %290
        %v292 = vadd.f32 %v277, %v278
        %293 = vadd.xlane.f32.xlu0 %v292
        %v294 = vpop.xlane.xlu0 %293
        %v295 = vadd.f32 %v279, %v285
        %v296 = vadd.f32 %v280, %v288
        %v297 = vadd.f32 %v281, %v291
        %v298 = vadd.f32 %v282, %v294
        %vm299 = vcmask 7168
        %300 = vst.msk [vmem:[#allocation2] sm:$0xff] %vm299, %v295
        %301 = vst.msk [vmem:[#allocation2 + $0x8] sm:$0xff] %vm299, %v296
        %302 = vst.msk [vmem:[#allocation2 + $0x10] sm:$0xff] %vm299, %v297
        %303 = vst.msk [vmem:[#allocation2 + $0x18] sm:$0xff] %vm299, %v298
        %p304 = scmp.eq.s32.totalorder %s24, 3
        // Predicated region
        $region49: #{tpu_custom_call.1} parent=39 // pred_check
          %p305 = pneg %p304
        $region50: #{tpu_custom_call.1} parent=39 // pred_check_branch
          %307 = sbr.rel (%p305) target = $region52
        $region51: #{tpu_custom_call.1} parent=39 // pred_region
          %v308 = vld [vmem:[#allocation2] sm:$0xff]
          %v309 = vld [vmem:[#allocation2 + $0x8] sm:$0xff]
          %v310 = vld [vmem:[#allocation2 + $0x10] sm:$0xff]
          %v311 = vld [vmem:[#allocation2 + $0x18] sm:$0xff]
          %v312 = vmul.f32 %v308, 0.0009765625
          %v313 = vmul.f32 %v309, 0.0009765625
          %v314 = vmul.f32 %v310, 0.0009765625
          %v315 = vmul.f32 %v311, 0.0009765625
          %v316 = vld [vmem:[%s1] sm:$0xff]
          %v317 = vld [vmem:[%s2] sm:$0xff]
          %vm318 = vcmask 261120
          %v320 = vsel %vm318, %v316, 0
          %322 = vmatprep.subr.mxu0 0.0
          %323 = vmatpush1.msra.mxu0 %v312
          %324 = vmatprep.subr.mxu0 0.0
          %325 = vmatpush1.msra.mxu0 %v313
          %326 = vmatprep.subr.mxu0 0.0
          %327 = vmatpush1.msra.mxu0 %v314
          %328 = vmatprep.subr.mxu0 0.0
          %329 = vmatpush1.msra.mxu0 %v315
          %330 = vmatprep.subr.mxu0 0.0
          %331 = vmatpush1.msra.mxu0 0.0
          %332 = vmatprep.subr.mxu0 0.0
          %333 = vmatpush1.msra.mxu0 0.0
          %334 = vmatprep.subr.mxu0 0.0
          %335 = vmatpush1.msra.mxu0 0.0
          %336 = vmatprep.subr.mxu0 0.0
          %337 = vmatpush1.msra.mxu0 0.0
          %338 = vmatprep.subr.mxu0 0.0
          %339 = vmatpush1.msra.mxu0 0.0
          %340 = vmatprep.subr.mxu0 0.0
          %341 = vmatpush1.msra.mxu0 0.0
          %342 = vmatprep.subr.mxu0 0.0
          %343 = vmatpush1.msra.mxu0 0.0
          %344 = vmatprep.subr.mxu0 0.0
          %345 = vmatpush1.msra.mxu0 0.0
          %346 = vmatprep.subr.mxu0 0.0
          %347 = vmatpush1.msra.mxu0 0.0
          %348 = vmatprep.subr.mxu0 0.0
          %349 = vmatpush1.msra.mxu0 0.0
          %350 = vmatprep.subr.mxu0 0.0
          %351 = vmatpush1.msra.mxu0 0.0
          %352 = vmatprep.subr.mxu0 0.0
          %353 = vmatpush1.msra.mxu0 0.0
          %354 = vmatprep.subr.mxu0 0.0
          %355 = vmatpush1.msra.mxu0 0.0
          %356 = vmatprep.subr.mxu0 0.0
          %357 = vmatpush1.msra.mxu0 0.0
          %358 = vmatprep.subr.mxu0 0.0
          %359 = vmatpush1.msra.mxu0 0.0
          %360 = vmatprep.subr.mxu0 0.0
          %361 = vmatpush1.msra.mxu0 0.0
          %362 = vmatprep.subr.mxu0 0.0
          %363 = vmatpush1.msra.mxu0 0.0
          %364 = vmatprep.subr.mxu0 0.0
          %365 = vmatpush1.msra.mxu0 0.0
          %366 = vmatprep.subr.mxu0 0.0
          %367 = vmatpush1.msra.mxu0 0.0
          %368 = vmatprep.subr.mxu0 0.0
          %369 = vmatpush1.msra.mxu0 0.0
          %370 = vmatprep.subr.mxu0 0.0
          %371 = vmatpush1.msra.mxu0 0.0
          %372 = vmatprep.subr.mxu0 0.0
          %373 = vmatpush1.msra.mxu0 0.0
          %374 = vmatprep.subr.mxu0 0.0
          %375 = vmatpush1.msra.mxu0 0.0
          %376 = vmatprep.subr.mxu0 0.0
          %377 = vmatpush1.msra.mxu0 0.0
          %378 = vmatprep.subr.mxu0 0.0
          %379 = vmatpush1.msra.mxu0 0.0
          %380 = vmatprep.subr.mxu0 0.0
          %381 = vmatpush1.msra.mxu0 0.0
          %382 = vmatprep.subr.mxu0 0.0
          %383 = vmatpush1.msra.mxu0 0.0
          %384 = vmatprep.subr.mxu0 0.0
          %385 = vmatpush1.msra.mxu0 0.0
          %386 = vmatprep.mubr.f32.mxu0 0.0
          %387 = vmatmul.mubr.f32.gmra.mrb[0].mxu0 %v320
          %v388 = vpop.f32.mrb[0].mxu0
          %v389 = vadd.f32 %v317, %v388
          %v390 = vpop.f32.mrb[0].mxu0
          %391 = vdwg.mxu0
          %v392 = vmax.f32 %v389, 0.0
          %v393 = vld [vmem:[%s3] sm:$0xff]
          %v394 = vld [vmem:[%s3 + $0x8] sm:$0xff]
          %v395 = vld [vmem:[%s3 + $0x10] sm:$0xff]
          %v396 = vld [vmem:[%s3 + $0x18] sm:$0xff]
          %v397 = vld [vmem:[%s4] sm:$0xff]
          %v398 = vld [vmem:[%s4 + $0x8] sm:$0xff]
          %v399 = vld [vmem:[%s4 + $0x10] sm:$0xff]
          %v400 = vld [vmem:[%s4 + $0x18] sm:$0xff]
          %vm401 = vcmask 64512
          %v403 = vsel %vm401, %v393, 0
          %v406 = vsel %vm401, %v394, 0
          %v409 = vsel %vm401, %v395, 0
          %v412 = vsel %vm401, %v396, 0
          %414 = vmatprep.subr.mxu0 0.0
          %415 = vmatpush1.msra.mxu0 %v392
          %416 = vmatprep.subr.mxu0 0.0
          %417 = vmatpush1.msra.mxu0 0.0
          %418 = vmatprep.subr.mxu0 0.0
          %419 = vmatpush1.msra.mxu0 0.0
          %420 = vmatprep.subr.mxu0 0.0
          %421 = vmatpush1.msra.mxu0 0.0
          %422 = vmatprep.subr.mxu0 0.0
          %423 = vmatpush1.msra.mxu0 0.0
          %424 = vmatprep.subr.mxu0 0.0
          %425 = vmatpush1.msra.mxu0 0.0
          %426 = vmatprep.subr.mxu0 0.0
          %427 = vmatpush1.msra.mxu0 0.0
          %428 = vmatprep.subr.mxu0 0.0
          %429 = vmatpush1.msra.mxu0 0.0
          %430 = vmatprep.subr.mxu0 0.0
          %431 = vmatpush1.msra.mxu0 0.0
          %432 = vmatprep.subr.mxu0 0.0
          %433 = vmatpush1.msra.mxu0 0.0
          %434 = vmatprep.subr.mxu0 0.0
          %435 = vmatpush1.msra.mxu0 0.0
          %436 = vmatprep.subr.mxu0 0.0
          %437 = vmatpush1.msra.mxu0 0.0
          %438 = vmatprep.subr.mxu0 0.0
          %439 = vmatpush1.msra.mxu0 0.0
          %440 = vmatprep.subr.mxu0 0.0
          %441 = vmatpush1.msra.mxu0 0.0
          %442 = vmatprep.subr.mxu0 0.0
          %443 = vmatpush1.msra.mxu0 0.0
          %444 = vmatprep.subr.mxu0 0.0
          %445 = vmatpush1.msra.mxu0 0.0
          %446 = vmatprep.subr.mxu0 0.0
          %447 = vmatpush1.msra.mxu0 0.0
          %448 = vmatprep.subr.mxu0 0.0
          %449 = vmatpush1.msra.mxu0 0.0
          %450 = vmatprep.subr.mxu0 0.0
          %451 = vmatpush1.msra.mxu0 0.0
          %452 = vmatprep.subr.mxu0 0.0
          %453 = vmatpush1.msra.mxu0 0.0
          %454 = vmatprep.subr.mxu0 0.0
          %455 = vmatpush1.msra.mxu0 0.0
          %456 = vmatprep.subr.mxu0 0.0
          %457 = vmatpush1.msra.mxu0 0.0
          %458 = vmatprep.subr.mxu0 0.0
          %459 = vmatpush1.msra.mxu0 0.0
          %460 = vmatprep.subr.mxu0 0.0
          %461 = vmatpush1.msra.mxu0 0.0
          %462 = vmatprep.subr.mxu0 0.0
          %463 = vmatpush1.msra.mxu0 0.0
          %464 = vmatprep.subr.mxu0 0.0
          %465 = vmatpush1.msra.mxu0 0.0
          %466 = vmatprep.subr.mxu0 0.0
          %467 = vmatpush1.msra.mxu0 0.0
          %468 = vmatprep.subr.mxu0 0.0
          %469 = vmatpush1.msra.mxu0 0.0
          %470 = vmatprep.subr.mxu0 0.0
          %471 = vmatpush1.msra.mxu0 0.0
          %472 = vmatprep.subr.mxu0 0.0
          %473 = vmatpush1.msra.mxu0 0.0
          %474 = vmatprep.subr.mxu0 0.0
          %475 = vmatpush1.msra.mxu0 0.0
          %476 = vmatprep.subr.mxu0 0.0
          %477 = vmatpush1.msra.mxu0 0.0
          %478 = vmatprep.mubr.f32.mxu0 0.0
          %479 = vmatmul.mubr.f32.gmra.mrb[0].mxu0 %v403
          %v480 = vpop.f32.mrb[0].mxu0
          %v481 = vadd.f32 %v397, %v480
          %v482 = vpop.f32.mrb[0].mxu0
          %483 = vmatprep.mubr.f32.mxu0 0.0
          %484 = vmatmul.mubr.f32.gmra.mrb[0].mxu0 %v406
          %v485 = vpop.f32.mrb[0].mxu0
          %v486 = vadd.f32 %v398, %v485
          %v487 = vpop.f32.mrb[0].mxu0
          %488 = vmatprep.mubr.f32.mxu0 0.0
          %489 = vmatmul.mubr.f32.gmra.mrb[0].mxu0 %v409
          %v490 = vpop.f32.mrb[0].mxu0
          %v491 = vadd.f32 %v399, %v490
          %v492 = vpop.f32.mrb[0].mxu0
          %493 = vmatprep.mubr.f32.mxu0 0.0
          %494 = vmatmul.mubr.f32.gmra.mrb[0].mxu0 %v412
          %v495 = vpop.f32.mrb[0].mxu0
          %v496 = vadd.f32 %v400, %v495
          %v497 = vpop.f32.mrb[0].mxu0
          %498 = vdwg.mxu0
          %v499 = vxor.u32 %v481, 2147483648
          %v500 = vxor.u32 %v486, 2147483648
          %v501 = vxor.u32 %v491, 2147483648
          %v502 = vxor.u32 %v496, 2147483648
          %v503 = vmul.f32 %v499, 1.442695
          %v504 = vpow.pop %v503
          %v505 = vmul.f32 %v500, 1.442695
          %v506 = vpow.pop %v505
          %v507 = vmul.f32 %v501, 1.442695
          %v508 = vpow.pop %v507
          %v509 = vmul.f32 %v502, 1.442695
          %v510 = vpow.pop %v509
          %v511 = vadd.f32 %v504, 1.0
          %v512 = vadd.f32 %v506, 1.0
          %v513 = vadd.f32 %v508, 1.0
          %v514 = vadd.f32 %v510, 1.0
          %v515 = vrcp.pop %v511
          %v516 = vmul.f32 1.0, %v515
          %v517 = vrcp.pop %v512
          %v518 = vmul.f32 1.0, %v517
          %v519 = vrcp.pop %v513
          %v520 = vmul.f32 1.0, %v519
          %v521 = vrcp.pop %v514
          %v522 = vmul.f32 1.0, %v521
          %523 = vst.msk [vmem:[%s261] sm:$0xff] %vm299, %v516
          %524 = vst.msk [vmem:[%s261 + $0x8] sm:$0xff] %vm299, %v518
          %525 = vst.msk [vmem:[%s261 + $0x10] sm:$0xff] %vm299, %v520
          %526 = vst.msk [vmem:[%s261 + $0x18] sm:$0xff] %vm299, %v522
        $region52: #{tpu_custom_call.1} parent=39 // pred_fallthru
          _
        %p527 = scmp.lt.s32.totalorder %s23, 1
        %s528 = scalar_select %p527, %s23, 1
        %s529 = smul.addr %s528, 4
        %s530 = smul.addr %s529, 8
        %s531 = scalar_lea.vmem %s5, %s530
        // Predicated region
        $region53: #{tpu_custom_call.1} parent=39 // pred_check
          %p532 = pneg %p161
        $region54: #{tpu_custom_call.1} parent=39 // pred_check_branch
          %534 = sbr.rel (%p532) target = $region56
        $region55: #{tpu_custom_call.1} parent=39 // pred_region
          _
        $region56: #{tpu_custom_call.1} parent=39 // pred_fallthru
          _
      $region40: #{tpu_custom_call.1} parent=5 // pred_fallthru
        _
      %p535 = scmp.le.s32.totalorder 2, %s14
      // Predicated region
      $region57: #{tpu_custom_call.1} parent=5 // pred_check
        %p536 = pneg %p535
      $region58: #{tpu_custom_call.1} parent=5 // pred_check_branch
        %538 = sbr.rel (%p536) target = $region60
      $region59: #{tpu_custom_call.1} parent=5 // pred_region
        %s539 = ssub.s32 %s14, 2
        // Predicated region
        $region61: #{tpu_custom_call.1} parent=59 // pred_check
          %p540 = pneg %p167
        $region62: #{tpu_custom_call.1} parent=59 // pred_check_branch
          %542 = sbr.rel (%p540) target = $region64
        $region63: #{tpu_custom_call.1} parent=59 // pred_region
          %p543 = scmp.lt.s32.totalorder %s25, 1
          %s544 = scalar_select %p543, %s25, 1
          %s545 = smul.addr %s544, 4
          %s546 = smul.addr %s545, 8
          %s547 = scalar_lea.vmem %s5, %s546
        $region64: #{tpu_custom_call.1} parent=59 // pred_fallthru
          _
      $region60: #{tpu_custom_call.1} parent=5 // pred_fallthru
        _
    $region6: #{tpu_custom_call.1} parent=1 // loop_footer
      %s18 = sadd.s32 1, %s14
    $region7: #{tpu_custom_call.1} parent=1 // loop_footer_branch
      %13 = sbr.rel target = $region3
    $region8: #{tpu_custom_call.1} parent=1 // loop_exit
      _
    %548 = vsyncpa [#allocation4], 1
    %s549 = scalar_lea.sflag [#allocation4], 1
    %550 = vsyncpa %s549, 1

</llo_original>
